<compile_context>
chip_gen: v7x
topology: tpu7x:2x2x1
jax: 0.10.0
libtpu: 0.0.40
codegen_flags: <defaults>
</compile_context>

<pallas_src>
import inspect

import jax
import jax.numpy as jnp
from jax import lax
from jax.experimental import pallas as pl
from jax.experimental.pallas import tpu as pltpu

_EPS = 1e-12                       # F.normalize default eps
_EPS2 = _EPS * _EPS                # max(sqrt(s), eps) == sqrt(max(s, eps^2)), s >= 0
_CHUNK = 512                       # lane chunk for the in-kernel reduction over D
_MAX_BLOCK_BYTES = 8 * 1024 * 1024  # per-input, per-buffer tile cap


def _round_up(x: int, m: int) -> int:
    return ((x + m - 1) // m) * m


def _vmem_capacity_bytes() -> int:
    try:
        cap = getattr(pltpu.get_tpu_info(), "vmem_capacity_bytes", None)
        if cap:
            return int(cap)
    except Exception:
        pass
    return 128 * 1024 * 1024


def _supports_pipeline_mode() -> bool:
    try:
        return hasattr(pl, "Buffered") and (
            "pipeline_mode" in inspect.signature(pl.BlockSpec).parameters)
    except (TypeError, ValueError):
        return False


def _make_kernel(*, g, d_seg, de, chunk, rows_out, total_rows, needs_mask):
    """Row-tile kernel.

    g        : original rows packed per lane-row (1 if unpacked)
    d_seg    : original feature dim D
    de       : packed feature dim of the tile (g * D)
    rows_out : original rows produced per grid step (block_rows * g)
    """
    n_full = de // chunk
    rem = de - n_full * chunk
    if g > 1:
        # Packed path always reduces the whole 128-lane packed row in one go.
        assert chunk == de and rem == 0

    def kernel(x1_ref, x2_ref, o_ref):
        def partial_sums(start, width, static):
            if static and start == 0 and width == de:
                a = x1_ref[...]
                b = x2_ref[...]
            elif static:
                a = x1_ref[:, start:start + width]
                b = x2_ref[:, start:start + width]
            else:
                s = pl.multiple_of(start, chunk) if chunk % 128 == 0 else start
                a = x1_ref[:, pl.ds(s, width)]
                b = x2_ref[:, pl.ds(s, width)]
            a = a.astype(jnp.float32)          # bf16 HBM -> f32 compute, per chunk
            b = b.astype(jnp.float32)
            p11, p22, p12 = a * a, b * b, a * b   # lane-dense products
            if g > 1:
                # 128 lanes hold g original rows of d_seg features each:
                # segmented per-original-row reduce.
                p11 = p11.reshape(rows_out, d_seg)
                p22 = p22.reshape(rows_out, d_seg)
                p12 = p12.reshape(rows_out, d_seg)
            return (jnp.sum(p11, axis=1),
                    jnp.sum(p22, axis=1),
                    jnp.sum(p12, axis=1))

        if n_full == 1 and rem == 0:
            s1, s2, s12 = partial_sums(0, de, True)
        else:
            zeros = jnp.zeros((rows_out,), jnp.float32)
            s1, s2, s12 = zeros, zeros, zeros
            if n_full == 1:
                a1, a2, a12 = partial_sums(0, chunk, True)
                s1, s2, s12 = s1 + a1, s2 + a2, s12 + a12
            elif n_full > 1:
                def body(i, carry):
                    c1, c2, c12 = carry
                    a1, a2, a12 = partial_sums(i * chunk, chunk, False)
                    return (c1 + a1, c2 + a2, c12 + a12)
                s1, s2, s12 = lax.fori_loop(0, n_full, body, (s1, s2, s12),
                                            unroll=(n_full <= 32))
            if rem > 0:
                a1, a2, a12 = partial_sums(n_full * chunk, rem, True)
                s1, s2, s12 = s1 + a1, s2 + a2, s12 + a12

        # Fused normalization (rsqrt runs on the EUP slot; no (TN, D) divides).
        inv = lax.rsqrt(jnp.maximum(s1, _EPS2)) * lax.rsqrt(jnp.maximum(s2, _EPS2))
        res = (s12 * inv)[None, :]                       # (1, rows_out), lane-dense

        if needs_mask:
            # Keep the discarded tail of the last (partial) block finite.
            base = pl.program_id(0) * rows_out
            row = lax.broadcasted_iota(jnp.int32, (1, rows_out), 1) + base
            res = jnp.where(row < total_rows, res, 0.0)

        o_ref[...] = jnp.exp(res)[None].astype(o_ref.dtype)   # (1, 1, rows_out)

    return kernel


def softmax_kernel(x1: jax.Array, x2: jax.Array, *,
                   block_rows: int | None = None) -> jax.Array:
    """exp(sum(F.normalize(x1) * F.normalize(x2), dim=1)) for 2-D x1, x2."""
    assert x1.ndim == 2 and x1.shape == x2.shape, (x1.shape, x2.shape)
    n, d = x1.shape

    # Promote mixed / non-float dtypes once so tile-size math sees the real itemsize.
    cdtype = jnp.promote_types(x1.dtype, x2.dtype)
    if not jnp.issubdtype(cdtype, jnp.floating):
        cdtype = jnp.float32
    if x1.dtype != cdtype:
        x1 = x1.astype(cdtype)
    if x2.dtype != cdtype:
        x2 = x2.astype(cdtype)
    out_dtype = cdtype

    if n == 0 or d == 0:
        return jnp.full((n,), 1.0, out_dtype) if n else jnp.zeros((0,), out_dtype)

    vmem_cap = _vmem_capacity_bytes()
    small_vmem = vmem_cap <= 64 * 1024 * 1024          # v7x-class: 64 MiB VMEM, 2 TCs
    vmem_limit = (48 if small_vmem else 96) * 1024 * 1024
    usable = int(vmem_limit * 0.6)                     # headroom: Mosaic internals, out bufs

    can_pack = (0 < d < 128) and (128 % d == 0) and (n % (128 // d) == 0)
    want_buffered = _supports_pipeline_mode() and not small_vmem

    def _run(use_packing: bool, use_buffered: bool) -> jax.Array:
        g = 128 // d if use_packing else 1
        de = g * d
        rows = n // g
        a = x1.reshape(rows, de) if g > 1 else x1       # free-ish under jit; lane-dense rows
        b = x2.reshape(rows, de) if g > 1 else x2

        n_buf = 3 if use_buffered else 2
        chunk = de if de <= _CHUNK else _CHUNK
        lane_de = _round_up(de, 128)
        lane_chunk = _round_up(chunk, 128)
        itemsize = jnp.dtype(cdtype).itemsize

        # VMEM bytes per (packed) row:
        #   pipelined input tiles (lane-padded, real itemsize)
        # + live f32 temporaries (2 casts + 3 products [+ segmented-reshape copy])
        # + accumulators and double-buffered output.
        io_bytes = 2 * n_buf * lane_de * itemsize
        tmp_bytes = (6 if g > 1 else 5) * lane_chunk * 4
        misc_bytes = (4 + n_buf) * 4 * g + 64
        per_row = io_bytes + tmp_bytes + misc_bytes

        if block_rows is None:
            by_budget = usable // per_row
            by_cap = _MAX_BLOCK_BYTES // max(1, lane_de * itemsize)
            br = max(8, (min(by_budget, by_cap) // 8) * 8)
        else:
            br = max(8, _round_up(block_rows, 8))

        if rows < 8:
            br = rows                                   # block == full dim (always legal)
        else:
            br = min(br, (rows // 8) * 8)
            if small_vmem and rows >= 16 and br >= rows:
                # >= 2 "parallel" grid blocks so both v7x TensorCores get work.
                br = min(br, max(8, _round_up(pl.cdiv(rows, 2), 8)))

        num_blocks = pl.cdiv(rows, br)
        rows_out = br * g
        needs_mask = num_blocks * br != rows

        kernel = _make_kernel(g=g, d_seg=d, de=de, chunk=chunk, rows_out=rows_out,
                              total_rows=n, needs_mask=needs_mask)

        if use_buffered:
            in_spec = pl.BlockSpec((br, de), lambda i: (i, 0),
                                   pipeline_mode=pl.Buffered(3))
        else:
            in_spec = pl.BlockSpec((br, de), lambda i: (i, 0))

        out3 = pl.pallas_call(
            kernel,
            out_shape=jax.ShapeDtypeStruct((num_blocks, 1, rows_out), out_dtype),
            grid_spec=pl.GridSpec(
                grid=(num_blocks,),
                in_specs=[in_spec, in_spec],
                out_specs=pl.BlockSpec((1, 1, rows_out), lambda i: (i, 0, 0)),
            ),
            compiler_params=pltpu.CompilerParams(
                dimension_semantics=("parallel",),
                vmem_limit_bytes=vmem_limit,
            ),
        )(a, b)

        # (num_blocks, 1, rows_out) -> flat -> first n rows (drops any row padding).
        return out3.reshape(num_blocks * rows_out)[:n]

    if can_pack or want_buffered:
        try:
            return _run(can_pack, want_buffered)
        except Exception:
            # Optional features (pipeline_mode / in-kernel segmented reshape) not
            # supported by this Pallas build -> plain plan. (Effective in eager
            # mode; under jit the optimized plan is used unconditionally.)
            pass
    return _run(False, False)


def _reference(x1, x2):
    def norm(x):
        x = x.astype(jnp.float32)
        nrm = jnp.sqrt(jnp.sum(x * x, axis=1, keepdims=True))
        return x / jnp.maximum(nrm, _EPS)
    return jnp.exp(jnp.sum(norm(x1) * norm(x2), axis=1))


if __name__ == "__main__":
    key = jax.random.PRNGKey(0)
    k1, k2, k3, k4, k5, k6 = jax.random.split(key, 6)

    # Case 1: small D (packed, lane-dense path), f32.
    n1, d1 = 8, 32
    a1 = jax.random.normal(k1, (n1, d1), dtype=jnp.float32)
    b1 = jax.random.normal(k2, (n1, d1), dtype=jnp.float32)
    out1 = jax.block_until_ready(softmax_kernel(a1, b1))
    ref1 = _reference(a1, b1)
    assert out1.shape == (n1,)
    assert jnp.allclose(out1, ref1, atol=2e-5, rtol=2e-5), (out1, ref1)

    # Case 2: wide D, N not a multiple of 8 (chunked reduction + tail + row mask).
    n2, d2 = 10, 1280
    a2 = jax.random.normal(k3, (n2, d2), dtype=jnp.float32)
    b2 = jax.random.normal(k4, (n2, d2), dtype=jnp.float32)
    out2 = jax.block_until_ready(softmax_kernel(a2, b2))
    ref2 = _reference(a2, b2)
    assert out2.shape == (n2,)
    assert jnp.allclose(out2, ref2, atol=2e-5, rtol=2e-5), (out2, ref2)

    # Case 3: bf16 inputs stay bf16 into the kernel (cast per chunk inside).
    n3, d3 = 16, 64
    a3 = jax.random.normal(k5, (n3, d3), dtype=jnp.bfloat16)
    b3 = jax.random.normal(k6, (n3, d3), dtype=jnp.bfloat16)
    out3 = jax.block_until_ready(softmax_kernel(a3, b3))
    ref3 = _reference(a3, b3)
    assert out3.shape == (n3,)
    assert jnp.allclose(out3.astype(jnp.float32), ref3, atol=1e-2, rtol=1e-2), (out3, ref3)

    print("KERNEL_OK")
</pallas_src>

<mosaic_0001>
module attributes {stable_mosaic.version = 11 : i64} {
  func.func @kernel(%arg0: i32, %arg1: memref<8x32xf32, #tpu.memory_space<vmem>>, %arg2: memref<8x32xf32, #tpu.memory_space<vmem>>, %arg3: memref<1x1x8xf32, #tpu.memory_space<vmem>>) attributes {dimension_semantics = [#tpu.dimension_semantics<parallel>], iteration_bounds = array<i64: 1>, scalar_prefetch = 0 : i64, scratch_operands = 0 : i64, tpu.core_type = #tpu.core_type<tc>, window_params = [{transform_indices = @transform_0, window_bounds = array<i64: 8, 32>}, {transform_indices = @transform_1, window_bounds = array<i64: 8, 32>}, {transform_indices = @transform_2, window_bounds = array<i64: 1, 1, 8>}]} {
    %c0 = arith.constant 0 : index
    %c0_0 = arith.constant 0 : index
    %0 = vector.load %arg1[%c0, %c0_0] : memref<8x32xf32, #tpu.memory_space<vmem>>, vector<8x32xf32>
    %c0_1 = arith.constant 0 : index
    %c0_2 = arith.constant 0 : index
    %1 = vector.load %arg2[%c0_1, %c0_2] : memref<8x32xf32, #tpu.memory_space<vmem>>, vector<8x32xf32>
    %2 = arith.mulf %0, %0 : vector<8x32xf32>
    %3 = arith.mulf %1, %1 : vector<8x32xf32>
    %4 = arith.mulf %0, %1 : vector<8x32xf32>
    %cst = arith.constant dense<0.000000e+00> : vector<8xf32>
    %5 = vector.multi_reduction <add>, %2, %cst [1] : vector<8x32xf32> to vector<8xf32>
    %cst_3 = arith.constant dense<0.000000e+00> : vector<8xf32>
    %6 = vector.multi_reduction <add>, %3, %cst_3 [1] : vector<8x32xf32> to vector<8xf32>
    %cst_4 = arith.constant dense<0.000000e+00> : vector<8xf32>
    %7 = vector.multi_reduction <add>, %4, %cst_4 [1] : vector<8x32xf32> to vector<8xf32>
    %cst_5 = arith.constant 1.000000e-24 : f32
    %8 = vector.broadcast %cst_5 : f32 to vector<8xf32>
    %9 = arith.maximumf %5, %8 : vector<8xf32>
    %10 = math.rsqrt %9 : vector<8xf32>
    %cst_6 = arith.constant 1.000000e-24 : f32
    %11 = vector.broadcast %cst_6 : f32 to vector<8xf32>
    %12 = arith.maximumf %6, %11 : vector<8xf32>
    %13 = math.rsqrt %12 : vector<8xf32>
    %14 = arith.mulf %10, %13 : vector<8xf32>
    %15 = arith.mulf %7, %14 : vector<8xf32>
    %16 = vector.shape_cast %15 : vector<8xf32> to vector<1x8xf32>
    %17 = math.exp %16 : vector<1x8xf32>
    %18 = vector.shape_cast %17 : vector<1x8xf32> to vector<1x1x8xf32>
    %c0_7 = arith.constant 0 : index
    %c0_8 = arith.constant 0 : index
    %c0_9 = arith.constant 0 : index
    %19 = vector.load %arg3[%c0_7, %c0_8, %c0_9] : memref<1x1x8xf32, #tpu.memory_space<vmem>>, vector<1x1x8xf32>
    tpu.vector_store %arg3[%c0_7, %c0_8, %c0_9], %18 {strides = array<i32>} : memref<1x1x8xf32, #tpu.memory_space<vmem>>, vector<1x1x8xf32>,
    return
  }
  func.func @transform_0(%arg0: i32) -> (i32, i32) {
    %c0_i32 = arith.constant 0 : i32
    %c0_i32_0 = arith.constant 0 : i32
    return %arg0, %c0_i32 : i32, i32
  }
  func.func @transform_1(%arg0: i32) -> (i32, i32) {
    %c0_i32 = arith.constant 0 : i32
    %c0_i32_0 = arith.constant 0 : i32
    return %arg0, %c0_i32 : i32, i32
  }
  func.func @transform_2(%arg0: i32) -> (i32, i32, i32) {
    %c0_i32 = arith.constant 0 : i32
    %c0_i32_0 = arith.constant 0 : i32
    %c0_i32_1 = arith.constant 0 : i32
    return %arg0, %c0_i32, %c0_i32_0 : i32, i32, i32
  }
}

</mosaic_0001>

<llo_original>
// kernel: tpu_custom_call.1
$region0: #{tpu_custom_call.1}
  #allocation0 [shape = 'u32[]', space=smem, size = 0x4, offset = 0x4, fixed_abs, tag = 'smem constant byte address 0x4 - core index']
  #allocation1 [shape = 'u32[144,128]{1,0:T(1,128)}', space=vmem, size = 0x12000, scoped, tag = 'internal scratch']
  %s0 = inlined_call_operand.hbm [shape: f32[8,32], index: 0, kind: input, shape index: {}]
  %s1 = inlined_call_operand.hbm [shape: f32[8,32], index: 1, kind: input, shape index: {}]
  %s2 = inlined_call_operand.hbm [shape: f32[1,1,8], index: 2, kind: output, shape index: {}]
  %s3 = sld [smem:[#allocation0]]
  $region26: #{tpu_custom_call.1} parent=0
    _
  %s5 = ssub.s32 1, %s3
  %s6 = scalar_select 0, %s5, %s3
  $region1: #{tpu_custom_call.1} parent=0
    #allocation2 [shape = 'u8[4096]{0}', space=vmem, size = 0x1000, scoped, tag = 'input window, operand 0, single buffered']
    #allocation3 [shape = 's32[1]{0}', space=sflag, size = 0x4, scoped, tag = 'scoped memory for tpu_custom_call.1']
    #allocation4 [shape = 's32[1]{0}', space=sflag, size = 0x4, scoped, tag = 'scoped memory for tpu_custom_call.1']
    #allocation5 [shape = 'u8[4096]{0}', space=vmem, size = 0x1000, scoped, tag = 'input window, operand 1, single buffered']
    #allocation6 [shape = 's32[1]{0}', space=sflag, size = 0x4, scoped, tag = 'scoped memory for tpu_custom_call.1']
    #allocation7 [shape = 'u8[512]{0}', space=vmem, size = 0x400, scoped, tag = 'output window, operand 0, single buffered']
    %7 = vsyncpa [#allocation3], 0
    %8 = vsyncpa [#allocation6], 0
    %9 = vsyncpa [#allocation4], 0
    // Predicated region
    $region2: #{tpu_custom_call.1} parent=1 // pred_check
      _
    $region3: #{tpu_custom_call.1} parent=1 // pred_check_branch
      %11 = sbr.rel (0) target = $region5
    $region4: #{tpu_custom_call.1} parent=1 // pred_region
      %s13 = ssub.s32 128, 128
      %14 = vsyncadd [#allocation3], %s13
      %s16 = sshll.u32 [#allocation2], 4
      %s17 = int_to_ptr.vmem [resolvable:$true] %s16
      %19 = dma.hbm_to_vmem [thread:$0]  %s0, 128, %s17, [#allocation3]
    $region5: #{tpu_custom_call.1} parent=1 // pred_fallthru
      _
    // Predicated region
    $region6: #{tpu_custom_call.1} parent=1 // pred_check
      _
    $region7: #{tpu_custom_call.1} parent=1 // pred_check_branch
      %21 = sbr.rel (0) target = $region9
    $region8: #{tpu_custom_call.1} parent=1 // pred_region
      %s23 = ssub.s32 128, 128
      %24 = vsyncadd [#allocation6], %s23
      %s26 = sshll.u32 [#allocation5], 4
      %s27 = int_to_ptr.vmem [resolvable:$true] %s26
      %29 = dma.hbm_to_vmem [thread:$0]  %s1, 128, %s27, [#allocation6]
    $region9: #{tpu_custom_call.1} parent=1 // pred_fallthru
      _
    // Predicated region
    $region10: #{tpu_custom_call.1} parent=1 // pred_check
      _
    $region11: #{tpu_custom_call.1} parent=1 // pred_check_branch
      %31 = sbr.rel (0) target = $region13
    $region12: #{tpu_custom_call.1} parent=1 // pred_region
      %32 = dma.done [#allocation3], 128
    $region13: #{tpu_custom_call.1} parent=1 // pred_fallthru
      _
    // Predicated region
    $region14: #{tpu_custom_call.1} parent=1 // pred_check
      _
    $region15: #{tpu_custom_call.1} parent=1 // pred_check_branch
      %34 = sbr.rel (0) target = $region17
    $region16: #{tpu_custom_call.1} parent=1 // pred_region
      %35 = dma.done [#allocation6], 128
    $region17: #{tpu_custom_call.1} parent=1 // pred_fallthru
      _
    %v36 = vld [vmem:[#allocation2] sm:$0xff]
    %v37 = vld [vmem:[#allocation5] sm:$0xff]
    %v38 = vmul.f32 %v36, %v36
    %v39 = vmul.f32 %v37, %v37
    %v40 = vmul.f32 %v36, %v37
    %vm41 = vcmask 261120
    %v42 = vsel %vm41, %v38, 0.0
    %43 = vadd.xlane.f32.xlu0 %v42
    %v44 = vpop.xlane.xlu0 %43
    %v45 = vsel %vm41, %v39, 0.0
    %46 = vadd.xlane.f32.xlu0 %v45
    %v47 = vpop.xlane.xlu0 %46
    %v48 = vsel %vm41, %v40, 0.0
    %49 = vadd.xlane.f32.xlu0 %v48
    %v50 = vpop.xlane.xlu0 %49
    %v51 = vmax.f32 %v44, 1e-24
    %v52 = vrsqrt.pop %v51
    %v53 = vmax.f32 %v47, 1e-24
    %v54 = vrsqrt.pop %v53
    %v55 = vmul.f32 %v52, %v54
    %v56 = vmul.f32 %v50, %v55
    %v57 = vmul.f32 %v56, 1.442695
    %v58 = vpow.pop %v57
    %v60 = vlaneseq
    %v61 = vand.u32 %v60, 127
    %v62 = vlaneseq
    %v63 = vshrl.u32 %v62, 7
    %v64 = vsub.s32 %v61, %v63
    %v65 = vrot.slane %v58, %v64
    %vm67 = vcmask 57344
    %68 = vst.msk [vmem:[#allocation7] sm:$0x1] %vm67, %v65
    // Predicated region
    $region18: #{tpu_custom_call.1} parent=1 // pred_check
      _
    $region19: #{tpu_custom_call.1} parent=1 // pred_check_branch
      %70 = sbr.rel (0) target = $region21
    $region20: #{tpu_custom_call.1} parent=1 // pred_region
      %s72 = ssub.s32 16, 16
      %73 = vsyncadd [#allocation4], %s72
      %s75 = sshll.u32 [#allocation7], 4
      %s76 = int_to_ptr.vmem [resolvable:$true] %s75
      %78 = dma.vmem_to_hbm [thread:$0]  %s76, 16, %s2, [#allocation4]
    $region21: #{tpu_custom_call.1} parent=1 // pred_fallthru
      _
    // Predicated region
    $region22: #{tpu_custom_call.1} parent=1 // pred_check
      _
    $region23: #{tpu_custom_call.1} parent=1 // pred_check_branch
      %80 = sbr.rel (0) target = $region25
    $region24: #{tpu_custom_call.1} parent=1 // pred_region
      %81 = dma.done [#allocation4], 16
    $region25: #{tpu_custom_call.1} parent=1 // pred_fallthru
      _
    %82 = vsyncpa [#allocation3], 1
    %83 = vsyncpa [#allocation6], 1
    %84 = vsyncpa [#allocation4], 1

</llo_original>
